<compile_context>
chip_gen: v5e
topology: v5e:2x2
jax: 0.10.0
libtpu: 0.0.40
codegen_flags: <defaults>
</compile_context>

<pallas_src>
import functools

import jax
import jax.numpy as jnp
from jax.experimental import pallas as pl
from jax.experimental.pallas import tpu as pltpu


# ----------------------------------------------------------------------------
# Kernel A: per-channel batch statistics of y = W @ x (y never written to HBM).
# Grid: (N, n_groups, tiles_per_group). Stats accumulate in VMEM scratch over
# the innermost ("arbitrary") tile axis and are written once per (n, group);
# (N, group) axes are "parallel" so both TensorCores get work even at N = 1.
# ----------------------------------------------------------------------------
def stats_kernel(x_ref, w_ref, sum_ref, sumsq_ref, sum_acc, sumsq_acc,
                 *, thw, hw, tiles_per_group, use_bf16, needs_mask):
    # x_ref: (C, thw)  w_ref: (C, C)  sum/sumsq refs + scratch: (C, 1)
    j = pl.program_id(2)

    @pl.when(j == 0)
    def _():
        sum_acc[...] = jnp.zeros_like(sum_acc)
        sumsq_acc[...] = jnp.zeros_like(sumsq_acc)

    x = x_ref[...]
    if use_bf16:
        x = x.astype(jnp.bfloat16)
    y = jnp.dot(w_ref[...], x, preferred_element_type=jnp.float32)

    if needs_mask:
        # Zero lanes past the end of H*W: ragged final tile, plus whole tiles
        # assigned to a group but beyond the array (their block index was
        # clamped in the index_map, so the data is valid but must not count).
        g = pl.program_id(1)
        start = (g * tiles_per_group + j) * thw
        lane = jax.lax.broadcasted_iota(jnp.int32, y.shape, dimension=1)
        y = jnp.where(start + lane < hw, y, 0.0)

    sum_acc[...] += jnp.sum(y, axis=1, keepdims=True)      # lane-axis reduce (XLU)
    sumsq_acc[...] += jnp.sum(y * y, axis=1, keepdims=True)

    @pl.when(j == pl.num_programs(2) - 1)
    def _():
        sum_ref[...] = sum_acc[...]
        sumsq_ref[...] = sumsq_acc[...]


# ----------------------------------------------------------------------------
# Kernel B: fused 1x1 conv (scale-folded weight) + shift + ReLU. NCHW in/out.
# shift is a per-channel (C, 1) column -> sublane-aligned broadcast.
# ----------------------------------------------------------------------------
def conv_bn_relu_kernel(x_ref, w_ref, shift_ref, o_ref, *, use_bf16):
    x = x_ref[...]
    if use_bf16:
        x = x.astype(jnp.bfloat16)
    y = jnp.dot(w_ref[...], x, preferred_element_type=jnp.float32)
    o_ref[...] = jnp.maximum(y + shift_ref[...], 0.0)


# ----------------------------------------------------------------------------
# Tiling / VMEM planning.
# ----------------------------------------------------------------------------
def _plan(hw, c, use_bf16):
    """Pick the lane tile (thw) and the VMEM limit request.

    thw is a multiple of 128 (unless H*W < 128, in which case the full
    extent is used); it does NOT have to divide H*W -- the grids use cdiv and
    the ragged final tile is masked. Budgeting keeps
      2x double-buffered (C, thw) f32 streams (x + out) + double-buffered W
    under ~52 MiB so the request stays below v7x's 64 MiB physical VMEM.
    """
    w_elem = 2 if use_bf16 else 4
    w_foot = 2 * c * c * w_elem                 # double-buffered W tile
    misc = 16 * c * 4 + (2 << 20)               # shift + scratch + margin
    budget = 52 * 1024 * 1024

    if hw < 128:
        thw = hw                                # full-extent lane dim (legal)
    else:
        avail = max(budget - w_foot - misc, 4 * (4 * c * 128))
        per_block = min(8 * 1024 * 1024, avail // 4)   # 4 = x,out double-buffered
        max_lanes = max(128, (per_block // (4 * c)) // 128 * 128)
        hw_ceil = -(-hw // 128) * 128
        thw = min(hw_ceil, max_lanes)

    need = 4 * c * thw * 4 + w_foot + misc
    # TODO(synk): K-tile C_in (f32 accumulator over a K grid axis) once
    # 2*C*C*w_elem alone approaches the 52 MiB budget (C >~ 3000 in bf16).
    vmem_limit = min(56 * 1024 * 1024, max(32 * 1024 * 1024, need))
    return thw, vmem_limit


def _conv_stats(x3, w_mm, *, thw, n_tiles, n_groups, tiles_per_group,
                vmem_limit, use_bf16):
    N, C, HW = x3.shape
    needs_mask = (HW % thw != 0) or (n_groups * tiles_per_group != n_tiles)
    clamp = n_groups * tiles_per_group != n_tiles

    def x_map(n, g, j):
        t = g * tiles_per_group + j
        if clamp:
            t = jnp.minimum(t, n_tiles - 1)     # keep block index in-bounds
        return (n, 0, t)

    kernel = functools.partial(
        stats_kernel, thw=thw, hw=HW, tiles_per_group=tiles_per_group,
        use_bf16=use_bf16, needs_mask=needs_mask)

    return pl.pallas_call(
        kernel,
        out_shape=(
            jax.ShapeDtypeStruct((N, n_groups, C, 1), jnp.float32),
            jax.ShapeDtypeStruct((N, n_groups, C, 1), jnp.float32),
        ),
        grid_spec=pltpu.PrefetchScalarGridSpec(
            num_scalar_prefetch=0,
            grid=(N, n_groups, tiles_per_group),
            in_specs=[
                pl.BlockSpec((None, C, thw), x_map),
                pl.BlockSpec((C, C), lambda n, g, j: (0, 0)),
            ],
            out_specs=[
                pl.BlockSpec((None, None, C, 1), lambda n, g, j: (n, g, 0, 0)),
                pl.BlockSpec((None, None, C, 1), lambda n, g, j: (n, g, 0, 0)),
            ],
            scratch_shapes=[
                pltpu.VMEM((C, 1), jnp.float32),
                pltpu.VMEM((C, 1), jnp.float32),
            ],
        ),
        compiler_params=pltpu.CompilerParams(
            dimension_semantics=("parallel", "parallel", "arbitrary"),
            vmem_limit_bytes=vmem_limit,
        ),
    )(x3, w_mm)


def _conv_bn_relu(x3, w_mm, shift, *, thw, vmem_limit, use_bf16):
    N, C, HW = x3.shape
    n_tiles = pl.cdiv(HW, thw)
    kernel = functools.partial(conv_bn_relu_kernel, use_bf16=use_bf16)
    return pl.pallas_call(
        kernel,
        out_shape=jax.ShapeDtypeStruct((N, C, HW), jnp.float32),
        grid_spec=pltpu.PrefetchScalarGridSpec(
            num_scalar_prefetch=0,
            grid=(N, n_tiles),
            in_specs=[
                pl.BlockSpec((None, C, thw), lambda n, j: (n, 0, j)),
                pl.BlockSpec((C, C), lambda n, j: (0, 0)),
                pl.BlockSpec((C, 1), lambda n, j: (0, 0)),
            ],
            out_specs=pl.BlockSpec((None, C, thw), lambda n, j: (n, 0, j)),
        ),
        compiler_params=pltpu.CompilerParams(
            dimension_semantics=("parallel", "parallel"),
            vmem_limit_bytes=vmem_limit,
        ),
    )(x3, w_mm, shift)


@functools.partial(jax.jit, static_argnames=("eps",))
def fc_forward(x_nchw, conv_w, conv_b, bn_gamma, bn_beta, eps=1e-5):
    """FC.forward: relu(batchnorm2d(conv1x1(x))), training-mode batch stats.

    x_nchw:  (N, C, H, W) float32
    conv_w:  (C, C, 1, 1) float32   (PyTorch Conv2d weight layout)
    conv_b:  (C,)          float32  (accepted for interface parity; it cancels
                                     exactly under training-mode BatchNorm and
                                     is therefore not used in the compute)
    bn_gamma, bn_beta: (C,) float32
    """
    del conv_b  # per-channel constant before BN cancels (mean absorbs it).

    N, C, H, W = x_nchw.shape
    HW = H * W
    M = N * HW

    use_bf16 = C >= 256   # bf16 MXU path once the matmul could become binding
    x3 = x_nchw.reshape(N, C, HW).astype(jnp.float32)     # free reshape of NCHW
    w = conv_w.reshape(C, C).astype(jnp.float32)          # (C_out, C_in)
    w_mm = w.astype(jnp.bfloat16) if use_bf16 else w      # prepared once

    thw, vmem_limit = _plan(HW, C, use_bf16)
    n_tiles = pl.cdiv(HW, thw)
    n_groups = 2 if n_tiles >= 2 else 1                   # feeds both TCs on v7x
    tiles_per_group = pl.cdiv(n_tiles, n_groups)

    # Pass 1: per-channel batch statistics of y = W @ x (y not materialized).
    sum_y, sumsq_y = _conv_stats(
        x3, w_mm, thw=thw, n_tiles=n_tiles, n_groups=n_groups,
        tiles_per_group=tiles_per_group, vmem_limit=vmem_limit,
        use_bf16=use_bf16)

    # Tiny cross-sample/group reduction + BN affine coefficients (JAX glue).
    total_sum = jnp.sum(sum_y, axis=(0, 1, 3))             # (C,)
    total_sumsq = jnp.sum(sumsq_y, axis=(0, 1, 3))          # (C,)
    mean = total_sum / M
    var = jnp.maximum(total_sumsq / M - mean * mean, 0.0)   # biased, clamped
    inv_std = jax.lax.rsqrt(var + eps)
    g = bn_gamma.astype(jnp.float32)
    b = bn_beta.astype(jnp.float32)
    scale = g * inv_std                                     # (C,)
    shift = (b - mean * scale).reshape(C, 1)                # (C, 1)

    # Fold the BN scale into W (per-output-channel row scaling): one fewer
    # VPU multiply per tile and one fewer streamed input in pass 2.
    w2 = w * scale[:, None]
    w2_mm = w2.astype(jnp.bfloat16) if use_bf16 else w2

    # Pass 2: fused conv + BN + ReLU, written directly in NCHW layout.
    out3 = _conv_bn_relu(x3, w2_mm, shift, thw=thw, vmem_limit=vmem_limit,
                         use_bf16=use_bf16)
    return out3.reshape(N, C, H, W)


if __name__ == "__main__":
    # Small shapes consistent with the module: x is NCHW with channels = dims.
    N, C, H, W = 2, 4, 16, 16
    key = jax.random.PRNGKey(0)
    kx, kw, kb = jax.random.split(key, 3)

    x = jax.random.normal(kx, (N, C, H, W), dtype=jnp.float32)
    conv_w = jax.random.normal(kw, (C, C, 1, 1), dtype=jnp.float32) * 0.5
    conv_b = jax.random.normal(kb, (C,), dtype=jnp.float32) * 0.1
    bn_gamma = jnp.ones((C,), dtype=jnp.float32)   # PyTorch default BN init
    bn_beta = jnp.zeros((C,), dtype=jnp.float32)
    # Note: self.dropout is nn.Identity here and is not applied in forward().

    out = fc_forward(x, conv_w, conv_b, bn_gamma, bn_beta)
    jax.block_until_ready(out)

    # Pure-JAX reference (includes the conv bias; it cancels under BN, so the
    # bias-free kernel must match to float32 rounding noise).
    x2d = jnp.transpose(x, (0, 2, 3, 1)).reshape(-1, C)
    y_ref = x2d @ conv_w.reshape(C, C).T + conv_b
    mean = y_ref.mean(axis=0)
    var = ((y_ref - mean) ** 2).mean(axis=0)
    ref2d = jnp.maximum(
        (y_ref - mean) * jax.lax.rsqrt(var + 1e-5) * bn_gamma + bn_beta, 0.0
    )
    ref = ref2d.reshape(N, H, W, C).transpose(0, 3, 1, 2)
    assert jnp.allclose(out, ref, atol=1e-4, rtol=1e-4), "mismatch vs reference"

    print("KERNEL_OK")
</pallas_src>

<mosaic_0001>
module attributes {stable_mosaic.version = 11 : i64} {
  func.func @stats_kernel(%arg0: i32, %arg1: i32, %arg2: i32, %arg3: memref<1x4x256xf32, #tpu.memory_space<vmem>>, %arg4: memref<4x4xf32, #tpu.memory_space<vmem>>, %arg5: memref<1x1x4x1xf32, #tpu.memory_space<vmem>>, %arg6: memref<1x1x4x1xf32, #tpu.memory_space<vmem>>, %arg7: memref<4x1xf32, #tpu.memory_space<vmem>>, %arg8: memref<4x1xf32, #tpu.memory_space<vmem>>) attributes {dimension_semantics = [#tpu.dimension_semantics<parallel>, #tpu.dimension_semantics<parallel>, #tpu.dimension_semantics<arbitrary>], iteration_bounds = array<i64: 2, 1, 1>, scalar_prefetch = 0 : i64, scratch_operands = 2 : i64, tpu.core_type = #tpu.core_type<tc>, window_params = [{transform_indices = @transform_0, window_bounds = array<i64: 1, 4, 256>}, {pipeline_mode = #tpu.pipeline_mode<synchronous>, transform_indices = @transform_1, window_bounds = array<i64: 4, 4>}, {transform_indices = @transform_2, window_bounds = array<i64: 1, 1, 4, 1>}, {transform_indices = @transform_3, window_bounds = array<i64: 1, 1, 4, 1>}]} {
    %c0_i32 = arith.constant 0 : i32
    %0 = arith.cmpi eq, %arg2, %c0_i32 : i32
    %1 = arith.extui %0 : i1 to i32
    %c0_i32_0 = arith.constant 0 : i32
    %2 = arith.cmpi ne, %1, %c0_i32_0 : i32
    scf.if %2 {
      %cst_17 = arith.constant 0.000000e+00 : f32
      %21 = vector.broadcast %cst_17 : f32 to vector<4x1xf32>
      %c0_18 = arith.constant 0 : index
      %c0_19 = arith.constant 0 : index
      %22 = vector.load %arg7[%c0_18, %c0_19] : memref<4x1xf32, #tpu.memory_space<vmem>>, vector<4x1xf32>
      tpu.vector_store %arg7[%c0_18, %c0_19], %21 {strides = array<i32>} : memref<4x1xf32, #tpu.memory_space<vmem>>, vector<4x1xf32>,
      %cst_20 = arith.constant 0.000000e+00 : f32
      %23 = vector.broadcast %cst_20 : f32 to vector<4x1xf32>
      %c0_21 = arith.constant 0 : index
      %c0_22 = arith.constant 0 : index
      %24 = vector.load %arg8[%c0_21, %c0_22] : memref<4x1xf32, #tpu.memory_space<vmem>>, vector<4x1xf32>
      tpu.vector_store %arg8[%c0_21, %c0_22], %23 {strides = array<i32>} : memref<4x1xf32, #tpu.memory_space<vmem>>, vector<4x1xf32>,
    } else {
    }
    %c0 = arith.constant 0 : index
    %c0_1 = arith.constant 0 : index
    %c0_2 = arith.constant 0 : index
    %3 = vector.load %arg3[%c0, %c0_1, %c0_2] : memref<1x4x256xf32, #tpu.memory_space<vmem>>, vector<1x4x256xf32>
    %4 = vector.shape_cast %3 : vector<1x4x256xf32> to vector<4x256xf32>
    %c0_3 = arith.constant 0 : index
    %c0_4 = arith.constant 0 : index
    %5 = vector.load %arg4[%c0_3, %c0_4] : memref<4x4xf32, #tpu.memory_space<vmem>>, vector<4x4xf32>
    %cst = arith.constant dense<0.000000e+00> : vector<4x256xf32>
    %6 = tpu.matmul %5, %4, %cst {dimension_numbers = #tpu.dot_dimension_numbers<[1], [0], [0], [1], [0, 0, 1, 1], [], []>} : vector<4x4xf32>, vector<4x256xf32>, vector<4x256xf32> -> vector<4x256xf32>
    %c0_5 = arith.constant 0 : index
    %c0_6 = arith.constant 0 : index
    %7 = vector.load %arg7[%c0_5, %c0_6] : memref<4x1xf32, #tpu.memory_space<vmem>>, vector<4x1xf32>
    %cst_7 = arith.constant dense<0.000000e+00> : vector<4xf32>
    %8 = vector.multi_reduction <add>, %6, %cst_7 [1] : vector<4x256xf32> to vector<4xf32>
    %9 = vector.shape_cast %8 : vector<4xf32> to vector<4x1xf32>
    %10 = arith.addf %7, %9 : vector<4x1xf32>
    %c0_8 = arith.constant 0 : index
    %c0_9 = arith.constant 0 : index
    %11 = vector.load %arg7[%c0_8, %c0_9] : memref<4x1xf32, #tpu.memory_space<vmem>>, vector<4x1xf32>
    tpu.vector_store %arg7[%c0_8, %c0_9], %10 {strides = array<i32>} : memref<4x1xf32, #tpu.memory_space<vmem>>, vector<4x1xf32>,
    %c0_10 = arith.constant 0 : index
    %c0_11 = arith.constant 0 : index
    %12 = vector.load %arg8[%c0_10, %c0_11] : memref<4x1xf32, #tpu.memory_space<vmem>>, vector<4x1xf32>
    %13 = arith.mulf %6, %6 : vector<4x256xf32>
    %cst_12 = arith.constant dense<0.000000e+00> : vector<4xf32>
    %14 = vector.multi_reduction <add>, %13, %cst_12 [1] : vector<4x256xf32> to vector<4xf32>
    %15 = vector.shape_cast %14 : vector<4xf32> to vector<4x1xf32>
    %16 = arith.addf %12, %15 : vector<4x1xf32>
    %c0_13 = arith.constant 0 : index
    %c0_14 = arith.constant 0 : index
    %17 = vector.load %arg8[%c0_13, %c0_14] : memref<4x1xf32, #tpu.memory_space<vmem>>, vector<4x1xf32>
    tpu.vector_store %arg8[%c0_13, %c0_14], %16 {strides = array<i32>} : memref<4x1xf32, #tpu.memory_space<vmem>>, vector<4x1xf32>,
    %c0_i32_15 = arith.constant 0 : i32
    %18 = arith.cmpi eq, %arg2, %c0_i32_15 : i32
    %19 = arith.extui %18 : i1 to i32
    %c0_i32_16 = arith.constant 0 : i32
    %20 = arith.cmpi ne, %19, %c0_i32_16 : i32
    scf.if %20 {
      %c0_17 = arith.constant 0 : index
      %c0_18 = arith.constant 0 : index
      %21 = vector.load %arg7[%c0_17, %c0_18] : memref<4x1xf32, #tpu.memory_space<vmem>>, vector<4x1xf32>
      %c0_19 = arith.constant 0 : index
      %c0_20 = arith.constant 0 : index
      %c0_21 = arith.constant 0 : index
      %c0_22 = arith.constant 0 : index
      %22 = vector.load %arg5[%c0_19, %c0_20, %c0_21, %c0_22] : memref<1x1x4x1xf32, #tpu.memory_space<vmem>>, vector<1x1x4x1xf32>
      %23 = vector.shape_cast %22 : vector<1x1x4x1xf32> to vector<4x1xf32>
      %24 = vector.shape_cast %21 : vector<4x1xf32> to vector<1x1x4x1xf32>
      tpu.vector_store %arg5[%c0_19, %c0_20, %c0_21, %c0_22], %24 {strides = array<i32>} : memref<1x1x4x1xf32, #tpu.memory_space<vmem>>, vector<1x1x4x1xf32>,
      %c0_23 = arith.constant 0 : index
      %c0_24 = arith.constant 0 : index
      %25 = vector.load %arg8[%c0_23, %c0_24] : memref<4x1xf32, #tpu.memory_space<vmem>>, vector<4x1xf32>
      %c0_25 = arith.constant 0 : index
      %c0_26 = arith.constant 0 : index
      %c0_27 = arith.constant 0 : index
      %c0_28 = arith.constant 0 : index
      %26 = vector.load %arg6[%c0_25, %c0_26, %c0_27, %c0_28] : memref<1x1x4x1xf32, #tpu.memory_space<vmem>>, vector<1x1x4x1xf32>
      %27 = vector.shape_cast %26 : vector<1x1x4x1xf32> to vector<4x1xf32>
      %28 = vector.shape_cast %25 : vector<4x1xf32> to vector<1x1x4x1xf32>
      tpu.vector_store %arg6[%c0_25, %c0_26, %c0_27, %c0_28], %28 {strides = array<i32>} : memref<1x1x4x1xf32, #tpu.memory_space<vmem>>, vector<1x1x4x1xf32>,
    } else {
    }
    return
  }
  func.func @transform_0(%arg0: i32, %arg1: i32, %arg2: i32) -> (i32, i32, i32) {
    %c1_i32 = arith.constant 1 : i32
    %0 = arith.muli %arg1, %c1_i32 : i32
    %1 = arith.addi %0, %arg2 : i32
    %c0_i32 = arith.constant 0 : i32
    %c0_i32_0 = arith.constant 0 : i32
    return %arg0, %c0_i32, %1 : i32, i32, i32
  }
  func.func @transform_1(%arg0: i32, %arg1: i32, %arg2: i32) -> (i32, i32) {
    %c0_i32 = arith.constant 0 : i32
    %c0_i32_0 = arith.constant 0 : i32
    %c0_i32_1 = arith.constant 0 : i32
    return %c0_i32, %c0_i32_0 : i32, i32
  }
  func.func @transform_2(%arg0: i32, %arg1: i32, %arg2: i32) -> (i32, i32, i32, i32) {
    %c0_i32 = arith.constant 0 : i32
    %c0_i32_0 = arith.constant 0 : i32
    %c0_i32_1 = arith.constant 0 : i32
    return %arg0, %arg1, %c0_i32, %c0_i32_0 : i32, i32, i32, i32
  }
  func.func @transform_3(%arg0: i32, %arg1: i32, %arg2: i32) -> (i32, i32, i32, i32) {
    %c0_i32 = arith.constant 0 : i32
    %c0_i32_0 = arith.constant 0 : i32
    %c0_i32_1 = arith.constant 0 : i32
    return %arg0, %arg1, %c0_i32, %c0_i32_0 : i32, i32, i32, i32
  }
}

module attributes {stable_mosaic.version = 11 : i64} {
  func.func @conv_bn_relu_kernel(%arg0: i32, %arg1: i32, %arg2: memref<1x4x256xf32, #tpu.memory_space<vmem>>, %arg3: memref<4x4xf32, #tpu.memory_space<vmem>>, %arg4: memref<4x1xf32, #tpu.memory_space<vmem>>, %arg5: memref<1x4x256xf32, #tpu.memory_space<vmem>>) attributes {dimension_semantics = [#tpu.dimension_semantics<parallel>, #tpu.dimension_semantics<parallel>], iteration_bounds = array<i64: 2, 1>, scalar_prefetch = 0 : i64, scratch_operands = 0 : i64, tpu.core_type = #tpu.core_type<tc>, window_params = [{transform_indices = @transform_0, window_bounds = array<i64: 1, 4, 256>}, {pipeline_mode = #tpu.pipeline_mode<synchronous>, transform_indices = @transform_1, window_bounds = array<i64: 4, 4>}, {pipeline_mode = #tpu.pipeline_mode<synchronous>, transform_indices = @transform_2, window_bounds = array<i64: 4, 1>}, {transform_indices = @transform_3, window_bounds = array<i64: 1, 4, 256>}]} {
    %c0 = arith.constant 0 : index
    %c0_0 = arith.constant 0 : index
    %c0_1 = arith.constant 0 : index
    %0 = vector.load %arg2[%c0, %c0_0, %c0_1] : memref<1x4x256xf32, #tpu.memory_space<vmem>>, vector<1x4x256xf32>
    %1 = vector.shape_cast %0 : vector<1x4x256xf32> to vector<4x256xf32>
    %c0_2 = arith.constant 0 : index
    %c0_3 = arith.constant 0 : index
    %2 = vector.load %arg3[%c0_2, %c0_3] : memref<4x4xf32, #tpu.memory_space<vmem>>, vector<4x4xf32>
    %cst = arith.constant dense<0.000000e+00> : vector<4x256xf32>
    %3 = tpu.matmul %2, %1, %cst {dimension_numbers = #tpu.dot_dimension_numbers<[1], [0], [0], [1], [0, 0, 1, 1], [], []>} : vector<4x4xf32>, vector<4x256xf32>, vector<4x256xf32> -> vector<4x256xf32>
    %c0_4 = arith.constant 0 : index
    %c0_5 = arith.constant 0 : index
    %4 = vector.load %arg4[%c0_4, %c0_5] : memref<4x1xf32, #tpu.memory_space<vmem>>, vector<4x1xf32>
    %5 = vector.broadcast %4 : vector<4x1xf32> to vector<4x256xf32>
    %6 = arith.addf %3, %5 : vector<4x256xf32>
    %cst_6 = arith.constant 0.000000e+00 : f32
    %7 = vector.broadcast %cst_6 : f32 to vector<4x256xf32>
    %8 = arith.maximumf %6, %7 : vector<4x256xf32>
    %c0_7 = arith.constant 0 : index
    %c0_8 = arith.constant 0 : index
    %c0_9 = arith.constant 0 : index
    %9 = vector.load %arg5[%c0_7, %c0_8, %c0_9] : memref<1x4x256xf32, #tpu.memory_space<vmem>>, vector<1x4x256xf32>
    %10 = vector.shape_cast %9 : vector<1x4x256xf32> to vector<4x256xf32>
    %11 = vector.shape_cast %8 : vector<4x256xf32> to vector<1x4x256xf32>
    tpu.vector_store %arg5[%c0_7, %c0_8, %c0_9], %11 {strides = array<i32>} : memref<1x4x256xf32, #tpu.memory_space<vmem>>, vector<1x4x256xf32>,
    return
  }
  func.func @transform_0(%arg0: i32, %arg1: i32) -> (i32, i32, i32) {
    %c0_i32 = arith.constant 0 : i32
    %c0_i32_0 = arith.constant 0 : i32
    return %arg0, %c0_i32, %arg1 : i32, i32, i32
  }
  func.func @transform_1(%arg0: i32, %arg1: i32) -> (i32, i32) {
    %c0_i32 = arith.constant 0 : i32
    %c0_i32_0 = arith.constant 0 : i32
    %c0_i32_1 = arith.constant 0 : i32
    return %c0_i32, %c0_i32_0 : i32, i32
  }
  func.func @transform_2(%arg0: i32, %arg1: i32) -> (i32, i32) {
    %c0_i32 = arith.constant 0 : i32
    %c0_i32_0 = arith.constant 0 : i32
    %c0_i32_1 = arith.constant 0 : i32
    return %c0_i32, %c0_i32_0 : i32, i32
  }
  func.func @transform_3(%arg0: i32, %arg1: i32) -> (i32, i32, i32) {
    %c0_i32 = arith.constant 0 : i32
    %c0_i32_0 = arith.constant 0 : i32
    return %arg0, %c0_i32, %arg1 : i32, i32, i32
  }
}

</mosaic_0001>

<llo_original>
// kernel: fc_forward.3
$region0: #{fc_forward.3}
  #allocation0 [shape = 'u32[]', space=smem, size = 0x4, offset = 0x4, fixed_abs, tag = 'smem constant byte address 0x4 - core index']
  #allocation1 [shape = 'u32[72,128]{1,0:T(1,128)}', space=vmem, size = 0x9000, scoped, tag = 'internal scratch']
  %s0 = inlined_call_operand.vmem [shape: f32[2,4,256], index: 0, kind: input, shape index: {}]
  %s1 = inlined_call_operand.vmem [shape: f32[4,4], index: 1, kind: input, shape index: {}]
  %s2 = inlined_call_operand.vmem [shape: f32[4,1], index: 2, kind: input, shape index: {}]
  %s3 = inlined_call_operand.vmem [shape: f32[2,4,256], index: 3, kind: output, shape index: {}]
  %s4 = sld [smem:[#allocation0]]
  $region45: #{fc_forward.3} parent=0
    _
  %s6 = ssub.s32 1, %s4
  %s7 = scalar_select 0, %s6, %s4
  loop: start=0, step=1, limit=4
  $region2: #{fc_forward.3} parent=0 // loop_pre_header
    _
  $region3: #{fc_forward.3} parent=0 // loop_header
    %s9 = sphi 0, %s13
    %p10 = scmp.ge.s32.totalorder %s9, 4
    %s16 = sphi 0, %s28
    %s17 = sphi 0, %s24
    %s18 = sphi 0, %s16
    %s19 = sphi 0, %s17
    %s20 = sphi 0, %s18
    %s21 = sphi 0, %s19
    %s33 = sphi 0, %s35
    %s36 = sphi 0, %s33
    %s37 = sphi 0, %s36
    %s53 = sphi 0, %s37
    %s57 = sphi 0, %s57
    %s59 = sphi 0, %s57
    %s60 = sphi 0, %s59
    %s74 = sphi 0, %s60
    %s78 = sphi 0, %s78
    %s80 = sphi 0, %s78
    %s81 = sphi 0, %s80
    %s95 = sphi 0, %s81
    %s103 = sphi 0, %s105
    %s106 = sphi 0, %s103
    %s107 = sphi 0, %s106
    %s123 = sphi 0, %s107
  $region4: #{fc_forward.3} parent=0 // loop_header_branch
    %12 = sbr.rel (%p10) target = $region8
  $region5: #{fc_forward.3} parent=0 // loop_body
    %s14 = ssub.s32 %s9, 1
    %s15 = ssub.s32 %s9, 2
    %s22 = sadd.s32 1, %s17
    %p23 = scmp.ge.s32.totalorder %s22, 1
    %s24 = scalar_select %p23, 0, %s22
    %s25 = sadd.s32 1, %s16
    %s26 = scalar_select %p23, %s25, %s16
    %p27 = scmp.ge.s32.totalorder %s26, 2
    %s28 = scalar_select %p27, 0, %s26
    %s29 = ssub.s32 %s16, %s28
    %s30 = ssub.s32 %s17, %s24
    %s31 = sor.u32 %s29, %s30
    %p32 = scmp.eq.s32.totalorder %s31, 0
    %s34 = sadd.s32 %s33, 1
    %s35 = scalar_select %p32, %s33, %s34
    %p38 = pneg %p32
    %p39 = scmp.eq.s32.totalorder %s9, 1
    %p40 = por %p38, %p39
    %p41 = scmp.ne.s32.totalorder %s33, %s36
    %p42 = scmp.eq.s32.totalorder %s9, 0
    %p43 = por %p41, %p42
    %p44 = scmp.ne.s32.totalorder %s33, %s36
    %p45 = scmp.eq.s32.totalorder %s14, 1
    %p46 = por %p44, %p45
    %p47 = scmp.ne.s32.totalorder %s36, %s37
    %p48 = scmp.eq.s32.totalorder %s14, 0
    %p49 = por %p47, %p48
    %p50 = scmp.ne.s32.totalorder %s36, %s37
    %p51 = scmp.eq.s32.totalorder %s15, 1
    %p52 = por %p50, %p51
    %p54 = scmp.ne.s32.totalorder %s37, %s53
    %p55 = scmp.eq.s32.totalorder %s15, 0
    %p56 = por %p54, %p55
    %s58 = sadd.s32 %s57, 1
    %p61 = scmp.eq.s32.totalorder %s9, 1
    %p62 = scmp.ne.s32.totalorder %s57, %s59
    %p63 = scmp.eq.s32.totalorder %s9, 0
    %p64 = por %p62, %p63
    %p65 = scmp.ne.s32.totalorder %s57, %s59
    %p66 = scmp.eq.s32.totalorder %s14, 1
    %p67 = por %p65, %p66
    %p68 = scmp.ne.s32.totalorder %s59, %s60
    %p69 = scmp.eq.s32.totalorder %s14, 0
    %p70 = por %p68, %p69
    %p71 = scmp.ne.s32.totalorder %s59, %s60
    %p72 = scmp.eq.s32.totalorder %s15, 1
    %p73 = por %p71, %p72
    %p75 = scmp.ne.s32.totalorder %s60, %s74
    %p76 = scmp.eq.s32.totalorder %s15, 0
    %p77 = por %p75, %p76
    %s79 = sadd.s32 %s78, 1
    %p82 = scmp.eq.s32.totalorder %s9, 1
    %p83 = scmp.ne.s32.totalorder %s78, %s80
    %p84 = scmp.eq.s32.totalorder %s9, 0
    %p85 = por %p83, %p84
    %p86 = scmp.ne.s32.totalorder %s78, %s80
    %p87 = scmp.eq.s32.totalorder %s14, 1
    %p88 = por %p86, %p87
    %p89 = scmp.ne.s32.totalorder %s80, %s81
    %p90 = scmp.eq.s32.totalorder %s14, 0
    %p91 = por %p89, %p90
    %p92 = scmp.ne.s32.totalorder %s80, %s81
    %p93 = scmp.eq.s32.totalorder %s15, 1
    %p94 = por %p92, %p93
    %p96 = scmp.ne.s32.totalorder %s81, %s95
    %p97 = scmp.eq.s32.totalorder %s15, 0
    %p98 = por %p96, %p97
    %s99 = ssub.s32 %s16, %s28
    %s100 = ssub.s32 %s17, %s24
    %s101 = sor.u32 %s99, %s100
    %p102 = scmp.eq.s32.totalorder %s101, 0
    %s104 = sadd.s32 %s103, 1
    %s105 = scalar_select %p102, %s103, %s104
    %p108 = pneg %p102
    %p109 = scmp.eq.s32.totalorder %s9, 1
    %p110 = por %p108, %p109
    %p111 = scmp.ne.s32.totalorder %s103, %s106
    %p112 = scmp.eq.s32.totalorder %s9, 0
    %p113 = por %p111, %p112
    %p114 = scmp.ne.s32.totalorder %s103, %s106
    %p115 = scmp.eq.s32.totalorder %s14, 1
    %p116 = por %p114, %p115
    %p117 = scmp.ne.s32.totalorder %s106, %s107
    %p118 = scmp.eq.s32.totalorder %s14, 0
    %p119 = por %p117, %p118
    %p120 = scmp.ne.s32.totalorder %s106, %s107
    %p121 = scmp.eq.s32.totalorder %s15, 1
    %p122 = por %p120, %p121
    %p124 = scmp.ne.s32.totalorder %s107, %s123
    %p125 = scmp.eq.s32.totalorder %s15, 0
    %p126 = por %p124, %p125
    %p127 = scmp.le.s32.totalorder 1, %s9
    %p128 = scmp.lt.s32.totalorder %s9, 3
    %p129 = pnand %p127, %p128
    %p130 = pneg %p129
    // Predicated region
    $region9: #{fc_forward.3} parent=5 // pred_check
      _
    $region10: #{fc_forward.3} parent=5 // pred_check_branch
      %132 = sbr.rel (%p129) target = $region12
    $region11: #{fc_forward.3} parent=5 // pred_region
      %s133 = ssub.s32 %s9, 1
      // Predicated region
      $region13: #{fc_forward.3} parent=11 // pred_check
        %p134 = pneg %p70
      $region14: #{fc_forward.3} parent=11 // pred_check_branch
        %136 = sbr.rel (%p134) target = $region16
      $region15: #{fc_forward.3} parent=11 // pred_region
        _
      $region16: #{fc_forward.3} parent=11 // pred_fallthru
        _
      // Predicated region
      $region17: #{fc_forward.3} parent=11 // pred_check
        %p137 = pneg %p91
      $region18: #{fc_forward.3} parent=11 // pred_check_branch
        %139 = sbr.rel (%p137) target = $region20
      $region19: #{fc_forward.3} parent=11 // pred_region
        _
      $region20: #{fc_forward.3} parent=11 // pred_fallthru
        _
    $region12: #{fc_forward.3} parent=5 // pred_fallthru
      _
    %p140 = scmp.lt.s32.totalorder %s9, 2
    // Predicated region
    $region21: #{fc_forward.3} parent=5 // pred_check
      %p141 = pneg %p140
    $region22: #{fc_forward.3} parent=5 // pred_check_branch
      %143 = sbr.rel (%p141) target = $region24
    $region23: #{fc_forward.3} parent=5 // pred_region
      // Predicated region
      $region25: #{fc_forward.3} parent=23 // pred_check
        %p144 = pneg %p43
      $region26: #{fc_forward.3} parent=23 // pred_check_branch
        %146 = sbr.rel (%p144) target = $region28
      $region27: #{fc_forward.3} parent=23 // pred_region
        %s147 = smul.u32 2, %s17
        %p148 = scmp.lt.s32.totalorder %s16, 1
        %s149 = scalar_select %p148, %s16, 1
        %p150 = scmp.lt.s32.totalorder %s147, 1
        %s151 = scalar_select %p150, %s147, 1
        %s152 = smul.addr %s149, 2
        %s153 = sadd.s32 %s151, %s152
        %s154 = smul.addr %s153, 4
        %s155 = scalar_lea.vmem %s0, %s154
        %s156 = smul.u32 2, %s17
      $region28: #{fc_forward.3} parent=23 // pred_fallthru
        _
    $region24: #{fc_forward.3} parent=5 // pred_fallthru
      _
    %p157 = scmp.le.s32.totalorder 1, %s9
    %p158 = scmp.lt.s32.totalorder %s9, 3
    %p159 = pnand %p157, %p158
    %p160 = pneg %p159
    // Predicated region
    $region29: #{fc_forward.3} parent=5 // pred_check
      _
    $region30: #{fc_forward.3} parent=5 // pred_check_branch
      %162 = sbr.rel (%p159) target = $region32
    $region31: #{fc_forward.3} parent=5 // pred_region
      %s163 = ssub.s32 %s9, 1
      %s164 = smul.u32 2, %s19
      %p165 = scmp.lt.s32.totalorder %s18, 1
      %s166 = scalar_select %p165, %s18, 1
      %p167 = scmp.lt.s32.totalorder %s164, 1
      %s168 = scalar_select %p167, %s164, 1
      %s169 = smul.addr %s166, 2
      %s170 = sadd.s32 %s168, %s169
      %s171 = smul.addr %s170, 4
      %s172 = scalar_lea.vmem %s0, %s171
      %p173 = pneg %p49
      %p174 = pneg %p46
      %p175 = pneg %p70
      %p176 = pneg %p67
      %p177 = pneg %p91
      %p178 = pneg %p88
      %p179 = pneg %p119
      %p180 = pneg %p116
      %s181 = smul.u32 2, %s19
      %p182 = scmp.lt.s32.totalorder %s18, 1
      %s183 = scalar_select %p182, %s18, 1
      %p184 = scmp.lt.s32.totalorder %s181, 1
      %s185 = scalar_select %p184, %s181, 1
      %s186 = smul.addr %s183, 2
      %s187 = sadd.s32 %s185, %s186
      %s188 = smul.addr %s187, 4
      %s189 = scalar_lea.vmem %s3, %s188
      %s190 = smul.u32 2, %s19
      %p191 = scmp.lt.s32.totalorder %s18, 1
      %s192 = scalar_select %p191, %s18, 1
      %p193 = scmp.lt.s32.totalorder %s190, 1
      %s194 = scalar_select %p193, %s190, 1
      %s195 = smul.addr %s192, 2
      %s196 = sadd.s32 %s194, %s195
      %s197 = smul.addr %s196, 4
      %s198 = scalar_lea.vmem %s0, %s197
      %s199 = smul.u32 2, %s19
      %s200 = smul.u32 2, %s19
      %p201 = scmp.lt.s32.totalorder %s18, 1
      %s202 = scalar_select %p201, %s18, 1
      %p203 = scmp.lt.s32.totalorder %s200, 1
      %s204 = scalar_select %p203, %s200, 1
      %s205 = smul.addr %s202, 2
      %s206 = sadd.s32 %s204, %s205
      %s207 = smul.addr %s206, 4
      %s208 = scalar_lea.vmem %s3, %s207
      %s209 = smul.u32 2, %s19
      %v210 = vld [vmem:[%s198] sm:$0xff]
      %v211 = vld [vmem:[%s1] sm:$0xf]
      %v212 = vld [vmem:[%s2] sm:$0xf]
      %214 = vset.pattern.permute.xlu0 0
      %215 = vperm.xlu0 %214, %v212
      %v216 = vpop.permute.xlu0 %215
      %219 = vst [vmem:[#allocation1] ss:$2 sm:$0xff] %v210
      %v220 = vld.sshfl [vmem:[#allocation1] sm:$0xff pattern:$0x75316420]
      %v221 = vld.sshfl [vmem:[#allocation1 + $0x8] sm:$0xff pattern:$0x75316420]
      %vm222 = vcmask 31744
      %v224 = vsel %vm222, %v211, 0
      %vm226 = vcmask 1043456
      %v227 = vsel %vm226, %v220, 0
      %v229 = vsel %vm226, %v221, 0
      %231 = vmatpush.msra.mxu0 0.0
      %232 = vmatpush.msra.mxu0 0.0
      %233 = vmatpush.msra.mxu0 0.0
      %234 = vmatpush.msra.mxu0 0.0
      %235 = vmatpush.msra.mxu0 0.0
      %236 = vmatpush.msra.mxu0 0.0
      %237 = vmatpush.msra.mxu0 0.0
      %238 = vmatpush.msra.mxu0 0.0
      %239 = vmatpush.msra.mxu0 0.0
      %240 = vmatpush.msra.mxu0 0.0
      %241 = vmatpush.msra.mxu0 0.0
      %242 = vmatpush.msra.mxu0 0.0
      %243 = vmatpush.msra.mxu0 0.0
      %244 = vmatpush.msra.mxu0 0.0
      %245 = vmatpush.msra.mxu0 0.0
      %246 = vmatpush.msra.mxu0 %v227
      %247 = vmatmul.f32.gmra.mxu0 %v224
      %v248 = vpop.f32.mrf.mxu0
      %v249 = vadd.f32 %v216, %v248
      %250 = vdwg.mxu0
      %251 = vmatpush.msra.mxu0 0.0
      %252 = vmatpush.msra.mxu0 0.0
      %253 = vmatpush.msra.mxu0 0.0
      %254 = vmatpush.msra.mxu0 0.0
      %255 = vmatpush.msra.mxu0 0.0
      %256 = vmatpush.msra.mxu0 0.0
      %257 = vmatpush.msra.mxu0 0.0
      %258 = vmatpush.msra.mxu0 0.0
      %259 = vmatpush.msra.mxu0 0.0
      %260 = vmatpush.msra.mxu0 0.0
      %261 = vmatpush.msra.mxu0 0.0
      %262 = vmatpush.msra.mxu0 0.0
      %263 = vmatpush.msra.mxu0 0.0
      %264 = vmatpush.msra.mxu0 0.0
      %265 = vmatpush.msra.mxu0 0.0
      %266 = vmatpush.msra.mxu0 %v229
      %267 = vmatmul.f32.gmra.mxu0 %v224
      %v268 = vpop.f32.mrf.mxu0
      %v269 = vadd.f32 %v216, %v268
      %270 = vdwg.mxu0
      %v271 = vmax.f32 %v249, 0.0
      %v272 = vmax.f32 %v269, 0.0
      %v275 = vrot.slane %v272, 4
      %v276 = vsel %vm226, %v271, %v275
      %278 = vst [vmem:[%s208] sm:$0xff] %v276
      %s279 = smul.u32 2, %s19
      %p280 = scmp.lt.s32.totalorder %s18, 1
      %s281 = scalar_select %p280, %s18, 1
      %p282 = scmp.lt.s32.totalorder %s279, 1
      %s283 = scalar_select %p282, %s279, 1
      %s284 = smul.addr %s281, 2
      %s285 = sadd.s32 %s283, %s284
      %s286 = smul.addr %s285, 4
      %s287 = scalar_lea.vmem %s3, %s286
      // Predicated region
      $region33: #{fc_forward.3} parent=31 // pred_check
        %p288 = pneg %p116
      $region34: #{fc_forward.3} parent=31 // pred_check_branch
        %290 = sbr.rel (%p288) target = $region36
      $region35: #{fc_forward.3} parent=31 // pred_region
        %s291 = smul.u32 2, %s19
      $region36: #{fc_forward.3} parent=31 // pred_fallthru
        _
    $region32: #{fc_forward.3} parent=5 // pred_fallthru
      _
    %p292 = scmp.le.s32.totalorder 2, %s9
    // Predicated region
    $region37: #{fc_forward.3} parent=5 // pred_check
      %p293 = pneg %p292
    $region38: #{fc_forward.3} parent=5 // pred_check_branch
      %295 = sbr.rel (%p293) target = $region40
    $region39: #{fc_forward.3} parent=5 // pred_region
      %s296 = ssub.s32 %s9, 2
      // Predicated region
      $region41: #{fc_forward.3} parent=39 // pred_check
        %p297 = pneg %p122
      $region42: #{fc_forward.3} parent=39 // pred_check_branch
        %299 = sbr.rel (%p297) target = $region44
      $region43: #{fc_forward.3} parent=39 // pred_region
        %s300 = smul.u32 2, %s21
        %p301 = scmp.lt.s32.totalorder %s20, 1
        %s302 = scalar_select %p301, %s20, 1
        %p303 = scmp.lt.s32.totalorder %s300, 1
        %s304 = scalar_select %p303, %s300, 1
        %s305 = smul.addr %s302, 2
        %s306 = sadd.s32 %s304, %s305
        %s307 = smul.addr %s306, 4
        %s308 = scalar_lea.vmem %s3, %s307
      $region44: #{fc_forward.3} parent=39 // pred_fallthru
        _
    $region40: #{fc_forward.3} parent=5 // pred_fallthru
      _
  $region6: #{fc_forward.3} parent=0 // loop_footer
    %s13 = sadd.s32 1, %s9
  $region7: #{fc_forward.3} parent=0 // loop_footer_branch
    %8 = sbr.rel target = $region3
  $region8: #{fc_forward.3} parent=0 // loop_exit
    _

// kernel: fc_forward.2
$region0: #{fc_forward.2}
  #allocation0 [shape = 'u32[]', space=smem, size = 0x4, offset = 0x4, fixed_abs, tag = 'smem constant byte address 0x4 - core index']
  #allocation1 [shape = 'u32[72,128]{1,0:T(1,128)}', space=vmem, size = 0x9000, scoped, tag = 'internal scratch']
  #allocation2 [shape = 'f32[4,1]{1,0:T(4,128)}', space=vmem, size = 0x800, scoped, tag = 'scratch operand']
  #allocation3 [shape = 'f32[4,1]{1,0:T(4,128)}', space=vmem, size = 0x800, scoped, tag = 'scratch operand']
  %s0 = inlined_call_operand.vmem [shape: f32[2,4,256], index: 0, kind: input, shape index: {}]
  %s1 = inlined_call_operand.vmem [shape: f32[4,4], index: 1, kind: input, shape index: {}]
  %s2 = inlined_call_operand.vmem [shape: f32[2,1,4,1], index: 2, kind: output, shape index: {0}]
  %s3 = inlined_call_operand.vmem [shape: f32[2,1,4,1], index: 3, kind: output, shape index: {1}]
  %4 = xla_tuple %s2, %s3
  %s5 = sld [smem:[#allocation0]]
  $region57: #{fc_forward.2} parent=0
    _
  %s7 = ssub.s32 1, %s5
  %s8 = scalar_select 0, %s7, %s5
  loop: start=0, step=1, limit=4
  $region2: #{fc_forward.2} parent=0 // loop_pre_header
    _
  $region3: #{fc_forward.2} parent=0 // loop_header
    %s10 = sphi 0, %s14
    %p11 = scmp.ge.s32.totalorder %s10, 4
    %s17 = sphi 0, %s36
    %s18 = sphi 0, %s32
    %s19 = sphi 0, %s28
    %s20 = sphi 0, %s17
    %s21 = sphi 0, %s18
    %s22 = sphi 0, %s19
    %s23 = sphi 0, %s20
    %s24 = sphi 0, %s21
    %s25 = sphi 0, %s22
    %s43 = sphi 0, %s45
    %s46 = sphi 0, %s43
    %s47 = sphi 0, %s46
    %s63 = sphi 0, %s47
    %s67 = sphi 0, %s67
    %s69 = sphi 0, %s67
    %s70 = sphi 0, %s69
    %s84 = sphi 0, %s70
    %s92 = sphi 0, %s94
    %s95 = sphi 0, %s92
    %s96 = sphi 0, %s95
    %s112 = sphi 0, %s96
    %s120 = sphi 0, %s122
    %s123 = sphi 0, %s120
    %s124 = sphi 0, %s123
    %s140 = sphi 0, %s124
  $region4: #{fc_forward.2} parent=0 // loop_header_branch
    %13 = sbr.rel (%p11) target = $region8
  $region5: #{fc_forward.2} parent=0 // loop_body
    %s15 = ssub.s32 %s10, 1
    %s16 = ssub.s32 %s10, 2
    %s26 = sadd.s32 1, %s19
    %p27 = scmp.ge.s32.totalorder %s26, 1
    %s28 = scalar_select %p27, 0, %s26
    %s29 = sadd.s32 1, %s18
    %s30 = scalar_select %p27, %s29, %s18
    %p31 = scmp.ge.s32.totalorder %s30, 1
    %s32 = scalar_select %p31, 0, %s30
    %s33 = sadd.s32 1, %s17
    %s34 = scalar_select %p31, %s33, %s17
    %p35 = scmp.ge.s32.totalorder %s34, 2
    %s36 = scalar_select %p35, 0, %s34
    %s37 = sadd.s32 %s18, %s19
    %s38 = sadd.s32 %s32, %s28
    %s39 = ssub.s32 %s17, %s36
    %s40 = ssub.s32 %s37, %s38
    %s41 = sor.u32 %s39, %s40
    %p42 = scmp.eq.s32.totalorder %s41, 0
    %s44 = sadd.s32 %s43, 1
    %s45 = scalar_select %p42, %s43, %s44
    %p48 = pneg %p42
    %p49 = scmp.eq.s32.totalorder %s10, 1
    %p50 = por %p48, %p49
    %p51 = scmp.ne.s32.totalorder %s43, %s46
    %p52 = scmp.eq.s32.totalorder %s10, 0
    %p53 = por %p51, %p52
    %p54 = scmp.ne.s32.totalorder %s43, %s46
    %p55 = scmp.eq.s32.totalorder %s15, 1
    %p56 = por %p54, %p55
    %p57 = scmp.ne.s32.totalorder %s46, %s47
    %p58 = scmp.eq.s32.totalorder %s15, 0
    %p59 = por %p57, %p58
    %p60 = scmp.ne.s32.totalorder %s46, %s47
    %p61 = scmp.eq.s32.totalorder %s16, 1
    %p62 = por %p60, %p61
    %p64 = scmp.ne.s32.totalorder %s47, %s63
    %p65 = scmp.eq.s32.totalorder %s16, 0
    %p66 = por %p64, %p65
    %s68 = sadd.s32 %s67, 1
    %p71 = scmp.eq.s32.totalorder %s10, 1
    %p72 = scmp.ne.s32.totalorder %s67, %s69
    %p73 = scmp.eq.s32.totalorder %s10, 0
    %p74 = por %p72, %p73
    %p75 = scmp.ne.s32.totalorder %s67, %s69
    %p76 = scmp.eq.s32.totalorder %s15, 1
    %p77 = por %p75, %p76
    %p78 = scmp.ne.s32.totalorder %s69, %s70
    %p79 = scmp.eq.s32.totalorder %s15, 0
    %p80 = por %p78, %p79
    %p81 = scmp.ne.s32.totalorder %s69, %s70
    %p82 = scmp.eq.s32.totalorder %s16, 1
    %p83 = por %p81, %p82
    %p85 = scmp.ne.s32.totalorder %s70, %s84
    %p86 = scmp.eq.s32.totalorder %s16, 0
    %p87 = por %p85, %p86
    %s88 = ssub.s32 %s17, %s36
    %s89 = ssub.s32 %s18, %s32
    %s90 = sor.u32 %s88, %s89
    %p91 = scmp.eq.s32.totalorder %s90, 0
    %s93 = sadd.s32 %s92, 1
    %s94 = scalar_select %p91, %s92, %s93
    %p97 = pneg %p91
    %p98 = scmp.eq.s32.totalorder %s10, 1
    %p99 = por %p97, %p98
    %p100 = scmp.ne.s32.totalorder %s92, %s95
    %p101 = scmp.eq.s32.totalorder %s10, 0
    %p102 = por %p100, %p101
    %p103 = scmp.ne.s32.totalorder %s92, %s95
    %p104 = scmp.eq.s32.totalorder %s15, 1
    %p105 = por %p103, %p104
    %p106 = scmp.ne.s32.totalorder %s95, %s96
    %p107 = scmp.eq.s32.totalorder %s15, 0
    %p108 = por %p106, %p107
    %p109 = scmp.ne.s32.totalorder %s95, %s96
    %p110 = scmp.eq.s32.totalorder %s16, 1
    %p111 = por %p109, %p110
    %p113 = scmp.ne.s32.totalorder %s96, %s112
    %p114 = scmp.eq.s32.totalorder %s16, 0
    %p115 = por %p113, %p114
    %s116 = ssub.s32 %s17, %s36
    %s117 = ssub.s32 %s18, %s32
    %s118 = sor.u32 %s116, %s117
    %p119 = scmp.eq.s32.totalorder %s118, 0
    %s121 = sadd.s32 %s120, 1
    %s122 = scalar_select %p119, %s120, %s121
    %p125 = pneg %p119
    %p126 = scmp.eq.s32.totalorder %s10, 1
    %p127 = por %p125, %p126
    %p128 = scmp.ne.s32.totalorder %s120, %s123
    %p129 = scmp.eq.s32.totalorder %s10, 0
    %p130 = por %p128, %p129
    %p131 = scmp.ne.s32.totalorder %s120, %s123
    %p132 = scmp.eq.s32.totalorder %s15, 1
    %p133 = por %p131, %p132
    %p134 = scmp.ne.s32.totalorder %s123, %s124
    %p135 = scmp.eq.s32.totalorder %s15, 0
    %p136 = por %p134, %p135
    %p137 = scmp.ne.s32.totalorder %s123, %s124
    %p138 = scmp.eq.s32.totalorder %s16, 1
    %p139 = por %p137, %p138
    %p141 = scmp.ne.s32.totalorder %s124, %s140
    %p142 = scmp.eq.s32.totalorder %s16, 0
    %p143 = por %p141, %p142
    %p144 = scmp.le.s32.totalorder 1, %s10
    %p145 = scmp.lt.s32.totalorder %s10, 3
    %p146 = pnand %p144, %p145
    %p147 = pneg %p146
    // Predicated region
    $region9: #{fc_forward.2} parent=5 // pred_check
      _
    $region10: #{fc_forward.2} parent=5 // pred_check_branch
      %149 = sbr.rel (%p146) target = $region12
    $region11: #{fc_forward.2} parent=5 // pred_region
      %s150 = ssub.s32 %s10, 1
      // Predicated region
      $region13: #{fc_forward.2} parent=11 // pred_check
        %p151 = pneg %p80
      $region14: #{fc_forward.2} parent=11 // pred_check_branch
        %153 = sbr.rel (%p151) target = $region16
      $region15: #{fc_forward.2} parent=11 // pred_region
        _
      $region16: #{fc_forward.2} parent=11 // pred_fallthru
        _
    $region12: #{fc_forward.2} parent=5 // pred_fallthru
      _
    %p154 = scmp.lt.s32.totalorder %s10, 2
    // Predicated region
    $region17: #{fc_forward.2} parent=5 // pred_check
      %p155 = pneg %p154
    $region18: #{fc_forward.2} parent=5 // pred_check_branch
      %157 = sbr.rel (%p155) target = $region20
    $region19: #{fc_forward.2} parent=5 // pred_region
      // Predicated region
      $region21: #{fc_forward.2} parent=19 // pred_check
        %p158 = pneg %p53
      $region22: #{fc_forward.2} parent=19 // pred_check_branch
        %160 = sbr.rel (%p158) target = $region24
      $region23: #{fc_forward.2} parent=19 // pred_region
        %s161 = sadd.s32 %s18, %s19
        %s162 = smul.u32 2, %s161
        %p163 = scmp.lt.s32.totalorder %s17, 1
        %s164 = scalar_select %p163, %s17, 1
        %p165 = scmp.lt.s32.totalorder %s162, 1
        %s166 = scalar_select %p165, %s162, 1
        %s167 = smul.addr %s164, 2
        %s168 = sadd.s32 %s166, %s167
        %s169 = smul.addr %s168, 4
        %s170 = scalar_lea.vmem %s0, %s169
        %s171 = sadd.s32 %s18, %s19
        %s172 = smul.u32 2, %s171
      $region24: #{fc_forward.2} parent=19 // pred_fallthru
        _
    $region20: #{fc_forward.2} parent=5 // pred_fallthru
      _
    %p173 = scmp.le.s32.totalorder 1, %s10
    %p174 = scmp.lt.s32.totalorder %s10, 3
    %p175 = pnand %p173, %p174
    %p176 = pneg %p175
    // Predicated region
    $region25: #{fc_forward.2} parent=5 // pred_check
      _
    $region26: #{fc_forward.2} parent=5 // pred_check_branch
      %178 = sbr.rel (%p175) target = $region28
    $region27: #{fc_forward.2} parent=5 // pred_region
      %s179 = ssub.s32 %s10, 1
      %s180 = sadd.s32 %s21, %s22
      %s181 = smul.u32 2, %s180
      %p182 = scmp.lt.s32.totalorder %s20, 1
      %s183 = scalar_select %p182, %s20, 1
      %p184 = scmp.lt.s32.totalorder %s181, 1
      %s185 = scalar_select %p184, %s181, 1
      %s186 = smul.addr %s183, 2
      %s187 = sadd.s32 %s185, %s186
      %s188 = smul.addr %s187, 4
      %s189 = scalar_lea.vmem %s0, %s188
      %p190 = pneg %p59
      %p191 = pneg %p56
      %p192 = pneg %p80
      %p193 = pneg %p77
      %p194 = pneg %p108
      %p195 = pneg %p105
      %p196 = scmp.lt.s32.totalorder %s20, 1
      %s197 = scalar_select %p196, %s20, 1
      %p198 = scmp.lt.s32.totalorder %s21, 0
      %s199 = scalar_select %p198, %s21, 0
      %s200 = sadd.s32 %s199, %s197
      %s201 = smul.addr %s200, 4
      %s202 = scalar_lea.vmem %s2, %s201
      %p203 = pneg %p136
      %p204 = pneg %p133
      %p205 = scmp.lt.s32.totalorder %s20, 1
      %s206 = scalar_select %p205, %s20, 1
      %p207 = scmp.lt.s32.totalorder %s21, 0
      %s208 = scalar_select %p207, %s21, 0
      %s209 = sadd.s32 %s208, %s206
      %s210 = smul.addr %s209, 4
      %s211 = scalar_lea.vmem %s3, %s210
      %s212 = sadd.s32 %s21, %s22
      %s213 = smul.u32 2, %s212
      %p214 = scmp.lt.s32.totalorder %s20, 1
      %s215 = scalar_select %p214, %s20, 1
      %p216 = scmp.lt.s32.totalorder %s213, 1
      %s217 = scalar_select %p216, %s213, 1
      %s218 = smul.addr %s215, 2
      %s219 = sadd.s32 %s217, %s218
      %s220 = smul.addr %s219, 4
      %s221 = scalar_lea.vmem %s0, %s220
      %s222 = sadd.s32 %s21, %s22
      %s223 = smul.u32 2, %s222
      %p224 = scmp.lt.s32.totalorder %s20, 1
      %s225 = scalar_select %p224, %s20, 1
      %p226 = scmp.lt.s32.totalorder %s21, 0
      %s227 = scalar_select %p226, %s21, 0
      %s228 = sadd.s32 %s227, %s225
      %s229 = smul.addr %s228, 4
      %s230 = scalar_lea.vmem %s2, %s229
      %p231 = scmp.lt.s32.totalorder %s20, 1
      %s232 = scalar_select %p231, %s20, 1
      %p233 = scmp.lt.s32.totalorder %s21, 0
      %s234 = scalar_select %p233, %s21, 0
      %s235 = sadd.s32 %s234, %s232
      %s236 = smul.addr %s235, 4
      %s237 = scalar_lea.vmem %s3, %s236
      %p238 = scmp.eq.s32.totalorder %s22, 0
      // Predicated region
      $region29: #{fc_forward.2} parent=27 // pred_check
        %p239 = pneg %p238
      $region30: #{fc_forward.2} parent=27 // pred_check_branch
        %241 = sbr.rel (%p239) target = $region32
      $region31: #{fc_forward.2} parent=27 // pred_region
        %vm242 = vcmask 3072
        %243 = vst.msk [vmem:[#allocation2] sm:$0xf] %vm242, 0.0
        %244 = vst.msk [vmem:[#allocation3] sm:$0xf] %vm242, 0.0
      $region32: #{fc_forward.2} parent=27 // pred_fallthru
        _
      %v245 = vld [vmem:[%s221] sm:$0xff]
      %v246 = vld [vmem:[%s1] sm:$0xf]
      %248 = vst [vmem:[#allocation1] ss:$2 sm:$0xff] %v245
      %v249 = vld.sshfl [vmem:[#allocation1] sm:$0xff pattern:$0x75316420]
      %v250 = vld.sshfl [vmem:[#allocation1 + $0x8] sm:$0xff pattern:$0x75316420]
      %vm251 = vcmask 31744
      %v253 = vsel %vm251, %v246, 0
      %vm255 = vcmask 1043456
      %v256 = vsel %vm255, %v249, 0
      %v258 = vsel %vm255, %v250, 0
      %260 = vmatpush.msra.mxu0 0.0
      %261 = vmatpush.msra.mxu0 0.0
      %262 = vmatpush.msra.mxu0 0.0
      %263 = vmatpush.msra.mxu0 0.0
      %264 = vmatpush.msra.mxu0 0.0
      %265 = vmatpush.msra.mxu0 0.0
      %266 = vmatpush.msra.mxu0 0.0
      %267 = vmatpush.msra.mxu0 0.0
      %268 = vmatpush.msra.mxu0 0.0
      %269 = vmatpush.msra.mxu0 0.0
      %270 = vmatpush.msra.mxu0 0.0
      %271 = vmatpush.msra.mxu0 0.0
      %272 = vmatpush.msra.mxu0 0.0
      %273 = vmatpush.msra.mxu0 0.0
      %274 = vmatpush.msra.mxu0 0.0
      %275 = vmatpush.msra.mxu0 %v256
      %276 = vmatmul.f32.gmra.mxu0 %v253
      %v277 = vpop.f32.mrf.mxu0
      %v278 = vadd.f32 0.0, %v277
      %279 = vdwg.mxu0
      %280 = vmatpush.msra.mxu0 0.0
      %281 = vmatpush.msra.mxu0 0.0
      %282 = vmatpush.msra.mxu0 0.0
      %283 = vmatpush.msra.mxu0 0.0
      %284 = vmatpush.msra.mxu0 0.0
      %285 = vmatpush.msra.mxu0 0.0
      %286 = vmatpush.msra.mxu0 0.0
      %287 = vmatpush.msra.mxu0 0.0
      %288 = vmatpush.msra.mxu0 0.0
      %289 = vmatpush.msra.mxu0 0.0
      %290 = vmatpush.msra.mxu0 0.0
      %291 = vmatpush.msra.mxu0 0.0
      %292 = vmatpush.msra.mxu0 0.0
      %293 = vmatpush.msra.mxu0 0.0
      %294 = vmatpush.msra.mxu0 0.0
      %295 = vmatpush.msra.mxu0 %v258
      %296 = vmatmul.f32.gmra.mxu0 %v253
      %v297 = vpop.f32.mrf.mxu0
      %v298 = vadd.f32 0.0, %v297
      %299 = vdwg.mxu0
      %v300 = vld [vmem:[#allocation2] sm:$0xf]
      %v301 = vsel %vm255, %v278, 0.0
      %v302 = vsel %vm255, %v298, 0.0
      %v303 = vadd.f32 %v301, %v302
      %304 = vadd.xlane.f32.xlu0 %v303
      %v305 = vpop.xlane.xlu0 %304
      %v306 = vadd.f32 %v300, %v305
      %vm307 = vcmask 3072
      %308 = vst.msk [vmem:[#allocation2] sm:$0xf] %vm307, %v306
      %v309 = vld [vmem:[#allocation3] sm:$0xf]
      %v310 = vmul.f32 %v278, %v278
      %v311 = vmul.f32 %v298, %v298
      %v312 = vsel %vm255, %v310, 0.0
      %v313 = vsel %vm255, %v311, 0.0
      %v314 = vadd.f32 %v312, %v313
      %315 = vadd.xlane.f32.xlu0 %v314
      %v316 = vpop.xlane.xlu0 %315
      %v317 = vadd.f32 %v309, %v316
      %318 = vst.msk [vmem:[#allocation3] sm:$0xf] %vm307, %v317
      // Predicated region
      $region33: #{fc_forward.2} parent=27 // pred_check
        %p319 = pneg %p238
      $region34: #{fc_forward.2} parent=27 // pred_check_branch
        %321 = sbr.rel (%p319) target = $region36
      $region35: #{fc_forward.2} parent=27 // pred_region
        %v322 = vld [vmem:[#allocation2] sm:$0xf]
        %323 = vst.msk [vmem:[%s230] sm:$0xf] %vm307, %v322
        %v324 = vld [vmem:[#allocation3] sm:$0xf]
        %325 = vst.msk [vmem:[%s237] sm:$0xf] %vm307, %v324
      $region36: #{fc_forward.2} parent=27 // pred_fallthru
        _
      %p326 = scmp.lt.s32.totalorder %s20, 1
      %s327 = scalar_select %p326, %s20, 1
      %p328 = scmp.lt.s32.totalorder %s21, 0
      %s329 = scalar_select %p328, %s21, 0
      %s330 = sadd.s32 %s329, %s327
      %s331 = smul.addr %s330, 4
      %s332 = scalar_lea.vmem %s2, %s331
      %p333 = scmp.lt.s32.totalorder %s20, 1
      %s334 = scalar_select %p333, %s20, 1
      %p335 = scmp.lt.s32.totalorder %s21, 0
      %s336 = scalar_select %p335, %s21, 0
      %s337 = sadd.s32 %s336, %s334
      %s338 = smul.addr %s337, 4
      %s339 = scalar_lea.vmem %s3, %s338
      // Predicated region
      $region37: #{fc_forward.2} parent=27 // pred_check
        %p340 = pneg %p105
      $region38: #{fc_forward.2} parent=27 // pred_check_branch
        %342 = sbr.rel (%p340) target = $region40
      $region39: #{fc_forward.2} parent=27 // pred_region
        _
      $region40: #{fc_forward.2} parent=27 // pred_fallthru
        _
      // Predicated region
      $region41: #{fc_forward.2} parent=27 // pred_check
        %p343 = pneg %p133
      $region42: #{fc_forward.2} parent=27 // pred_check_branch
        %345 = sbr.rel (%p343) target = $region44
      $region43: #{fc_forward.2} parent=27 // pred_region
        _
      $region44: #{fc_forward.2} parent=27 // pred_fallthru
        _
    $region28: #{fc_forward.2} parent=5 // pred_fallthru
      _
    %p346 = scmp.le.s32.totalorder 2, %s10
    // Predicated region
    $region45: #{fc_forward.2} parent=5 // pred_check
      %p347 = pneg %p346
    $region46: #{fc_forward.2} parent=5 // pred_check_branch
      %349 = sbr.rel (%p347) target = $region48
    $region47: #{fc_forward.2} parent=5 // pred_region
      %s350 = ssub.s32 %s10, 2
      // Predicated region
      $region49: #{fc_forward.2} parent=47 // pred_check
        %p351 = pneg %p111
      $region50: #{fc_forward.2} parent=47 // pred_check_branch
        %353 = sbr.rel (%p351) target = $region52
      $region51: #{fc_forward.2} parent=47 // pred_region
        %p354 = scmp.lt.s32.totalorder %s23, 1
        %s355 = scalar_select %p354, %s23, 1
        %p356 = scmp.lt.s32.totalorder %s24, 0
        %s357 = scalar_select %p356, %s24, 0
        %s358 = sadd.s32 %s357, %s355
        %s359 = smul.addr %s358, 4
        %s360 = scalar_lea.vmem %s2, %s359
      $region52: #{fc_forward.2} parent=47 // pred_fallthru
        _
      // Predicated region
      $region53: #{fc_forward.2} parent=47 // pred_check
        %p361 = pneg %p139
      $region54: #{fc_forward.2} parent=47 // pred_check_branch
        %363 = sbr.rel (%p361) target = $region56
      $region55: #{fc_forward.2} parent=47 // pred_region
        %p364 = scmp.lt.s32.totalorder %s23, 1
        %s365 = scalar_select %p364, %s23, 1
        %p366 = scmp.lt.s32.totalorder %s24, 0
        %s367 = scalar_select %p366, %s24, 0
        %s368 = sadd.s32 %s367, %s365
        %s369 = smul.addr %s368, 4
        %s370 = scalar_lea.vmem %s3, %s369
      $region56: #{fc_forward.2} parent=47 // pred_fallthru
        _
    $region48: #{fc_forward.2} parent=5 // pred_fallthru
      _
  $region6: #{fc_forward.2} parent=0 // loop_footer
    %s14 = sadd.s32 1, %s10
  $region7: #{fc_forward.2} parent=0 // loop_footer_branch
    %9 = sbr.rel target = $region3
  $region8: #{fc_forward.2} parent=0 // loop_exit
    _

</llo_original>
